<compile_context>
chip_gen: v5e
topology: v5e:2x2
jax: 0.10.0
libtpu: 0.0.40
codegen_flags: <defaults>
</compile_context>

<pallas_src>
import jax
import jax.numpy as jnp
from jax.experimental import pallas as pl
from jax.experimental.pallas import tpu as pltpu


def _round_up(x, m):
    return ((x + m - 1) // m) * m


def _pick_dim_tile(dim, align, cap):
    """Pick (tile, padded_dim) for one dimension.

    dims that fit in one block use the full (alignment-rounded) extent; dims
    smaller than the lane/sublane alignment use a full-extent block with NO
    padding (allowed by the (8,128) rule).  Larger dims pick the biggest
    power-of-two tile <= cap with <=10% padding waste.
    """
    if dim <= cap:
        if dim < align:
            return dim, dim                      # full-extent block, no pad
        padded = _round_up(dim, align)
        return padded, padded                    # one block covers the dim
    t = cap
    while t > align:
        padded = _round_up(dim, t)
        if (padded - dim) * 10 <= dim:           # <= 10% waste
            return t, padded
        t //= 2
    return t, _round_up(dim, t)


def linear_block_kernel(x_ref, w_ref, b_ref, o_ref, acc_ref):
    # x_ref: (tm, tk) bf16, w_ref: (tk, tn) bf16 (weight already transposed),
    # b_ref: (1, tn) f32, o_ref: (tm, tn) f32, acc_ref: (tm, tn) f32 scratch.
    k = pl.program_id(2)

    @pl.when(k == 0)
    def _():
        # Initialize the accumulator with the broadcast bias: the epilogue
        # then needs no extra add.
        acc_ref[...] = jnp.broadcast_to(b_ref[...], acc_ref.shape)

    # bf16 x bf16 -> f32 accumulation on the MXU; RHS contracted on its
    # sublane (first) dim, so no in-kernel transpose is required.
    acc_ref[...] += jnp.dot(
        x_ref[...], w_ref[...], preferred_element_type=jnp.float32
    )

    @pl.when(k == pl.num_programs(2) - 1)
    def _():
        y = acc_ref[...]
        # LeakyReLU(0.2) == max(y, 0.2*y) for slope in (0, 1).
        o_ref[...] = jnp.maximum(y, 0.2 * y).astype(o_ref.dtype)


def linear_block(x, weight, bias, *, tm=None, tn=None, tk=None):
    """
    x:      [M, K] float32
    weight: [N, K] float32 (PyTorch nn.Linear layout: out_features x in_features)
    bias:   [N]    float32
    returns [M, N] float32 = leaky_relu(x @ weight.T + bias, 0.2)
    """
    M, K = x.shape
    N, K2 = weight.shape
    assert K == K2 and bias.shape == (N,)

    # --- tile selection (bf16 inputs, f32 accumulator/output) -------------
    if tm is None:
        tm, Mp = _pick_dim_tile(M, 8, 512)
    else:
        Mp = _round_up(M, tm)
    if tn is None:
        tn, Np = _pick_dim_tile(N, 128, 1024)
    else:
        Np = _round_up(N, tn)
    if tk is None:
        # tk as large as possible: fewer f32 accumulator read-modify-write
        # passes through the vld/vst slots.
        tk, Kp = _pick_dim_tile(K, 128, 2048)
    else:
        Kp = _round_up(K, tk)

    # v7x has 2 TensorCores: keep >= 2 parallel (M,N) blocks when the tiles
    # are big enough to split without breaking (8,128) alignment.
    if (Mp // tm) * (Np // tn) == 1:
        if tn >= 256 and tn % 256 == 0:
            tn //= 2
        elif tm >= 16 and tm % 16 == 0:
            tm //= 2

    grid = (Mp // tm, Np // tn, Kp // tk)

    # --- one-time layout prep ---------------------------------------------
    # Transpose the weight to [K, N] so the MXU contracts the RHS on its
    # sublane dim (no per-step XLU transpose), then cast inputs to bf16.
    # TODO(synk): in a real model, pre-transpose/pre-cast/pre-pad the weight
    # once at parameter-load time instead of per call.
    wt = weight.T  # [K, N]
    xp = x if (Mp == M and Kp == K) else jnp.pad(x, ((0, Mp - M), (0, Kp - K)))
    wp = wt if (Kp == K and Np == N) else jnp.pad(wt, ((0, Kp - K), (0, Np - N)))
    bp = bias if Np == N else jnp.pad(bias, (0, Np - N))

    x_bf = xp.astype(jnp.bfloat16)
    w_bf = wp.astype(jnp.bfloat16)
    b2d = bp.astype(jnp.float32).reshape(1, Np)

    # --- VMEM budget: double-buffered bf16 inputs + f32 out + f32 acc ------
    working = (2 * tm * tk * 2      # x tiles (bf16, double-buffered)
               + 2 * tk * tn * 2    # weight tiles (bf16, double-buffered)
               + 2 * tm * tn * 4    # output tiles (f32, double-buffered)
               + tm * tn * 4        # accumulator scratch
               + tn * 4)            # bias tile
    # Raise the scoped-VMEM limit above the v5e 16 MiB default but stay well
    # inside v7x's 64 MiB physical VMEM.
    vmem_limit = int(min(48 * 1024 * 1024, max(32 * 1024 * 1024, 2 * working)))

    gm, gn, gk = grid
    cost = pl.CostEstimate(
        flops=2 * Mp * Np * Kp,
        transcendentals=0,
        # x is re-read once per N block, the weight once per M block.
        bytes_accessed=(2 * Mp * Kp * gn
                        + 2 * Kp * Np * gm
                        + 4 * Mp * Np
                        + 4 * Np * gm * gn),
    )

    out_p = pl.pallas_call(
        linear_block_kernel,
        out_shape=jax.ShapeDtypeStruct((Mp, Np), jnp.float32),
        grid_spec=pltpu.PrefetchScalarGridSpec(
            num_scalar_prefetch=0,
            grid=grid,
            in_specs=[
                pl.BlockSpec((tm, tk), lambda i, j, k: (i, k)),   # x tile
                pl.BlockSpec((tk, tn), lambda i, j, k: (k, j)),   # W.T tile
                pl.BlockSpec((1, tn), lambda i, j, k: (0, j)),    # bias tile
            ],
            out_specs=pl.BlockSpec((tm, tn), lambda i, j, k: (i, j)),
            scratch_shapes=[pltpu.VMEM((tm, tn), jnp.float32)],
        ),
        compiler_params=pltpu.CompilerParams(
            dimension_semantics=("parallel", "parallel", "arbitrary"),
            vmem_limit_bytes=vmem_limit,
        ),
        cost_estimate=cost,
    )(x_bf, w_bf, b2d)

    return out_p[:M, :N]


def reference(x, weight, bias):
    y = x @ weight.T + bias
    return jnp.where(y >= 0, y, 0.2 * y)


if __name__ == "__main__":
    key = jax.random.PRNGKey(0)
    k_x, k_w, k_b = jax.random.split(key, 3)

    batch, in_channels, out_channels = 8, 32, 64

    # Deterministic "PyTorch-like" init: U(-1/sqrt(in), 1/sqrt(in))
    bound = 1.0 / jnp.sqrt(jnp.float32(in_channels))
    x = jax.random.normal(k_x, (batch, in_channels), dtype=jnp.float32)
    weight = jax.random.uniform(
        k_w, (out_channels, in_channels), minval=-bound, maxval=bound,
        dtype=jnp.float32)
    bias = jax.random.uniform(
        k_b, (out_channels,), minval=-bound, maxval=bound, dtype=jnp.float32)

    out = jax.block_until_ready(linear_block(x, weight, bias))

    ref = reference(x, weight, bias)
    assert out.shape == (batch, out_channels)
    # bf16 MXU inputs with f32 accumulation -> looser tolerance than pure f32.
    assert jnp.allclose(out, ref, atol=2e-2, rtol=2e-2)

    print("KERNEL_OK")
</pallas_src>

<mosaic_0001>
module attributes {stable_mosaic.version = 11 : i64} {
  func.func @linear_block_kernel(%arg0: i32, %arg1: i32, %arg2: i32, %arg3: memref<8x32xbf16, #tpu.memory_space<vmem>>, %arg4: memref<32x64xbf16, #tpu.memory_space<vmem>>, %arg5: memref<1x64xf32, #tpu.memory_space<vmem>>, %arg6: memref<8x64xf32, #tpu.memory_space<vmem>>, %arg7: memref<8x64xf32, #tpu.memory_space<vmem>>) attributes {dimension_semantics = [#tpu.dimension_semantics<parallel>, #tpu.dimension_semantics<parallel>, #tpu.dimension_semantics<arbitrary>], iteration_bounds = array<i64: 1, 1, 1>, scalar_prefetch = 0 : i64, scratch_operands = 1 : i64, tpu.core_type = #tpu.core_type<tc>, window_params = [{transform_indices = @transform_0, window_bounds = array<i64: 8, 32>}, {transform_indices = @transform_1, window_bounds = array<i64: 32, 64>}, {transform_indices = @transform_2, window_bounds = array<i64: 1, 64>}, {transform_indices = @transform_3, window_bounds = array<i64: 8, 64>}]} {
    %c0_i32 = arith.constant 0 : i32
    %0 = arith.cmpi eq, %arg2, %c0_i32 : i32
    %1 = arith.extui %0 : i1 to i32
    %c0_i32_0 = arith.constant 0 : i32
    %2 = arith.cmpi ne, %1, %c0_i32_0 : i32
    scf.if %2 {
      %c0_10 = arith.constant 0 : index
      %c0_11 = arith.constant 0 : index
      %12 = vector.load %arg5[%c0_10, %c0_11] : memref<1x64xf32, #tpu.memory_space<vmem>>, vector<1x64xf32>
      %13 = vector.shape_cast %12 : vector<1x64xf32> to vector<1x64xf32>
      %14 = vector.broadcast %13 : vector<1x64xf32> to vector<8x64xf32>
      %c0_12 = arith.constant 0 : index
      %c0_13 = arith.constant 0 : index
      %15 = vector.load %arg7[%c0_12, %c0_13] : memref<8x64xf32, #tpu.memory_space<vmem>>, vector<8x64xf32>
      tpu.vector_store %arg7[%c0_12, %c0_13], %14 {strides = array<i32>} : memref<8x64xf32, #tpu.memory_space<vmem>>, vector<8x64xf32>,
    } else {
    }
    %c0 = arith.constant 0 : index
    %c0_1 = arith.constant 0 : index
    %3 = vector.load %arg7[%c0, %c0_1] : memref<8x64xf32, #tpu.memory_space<vmem>>, vector<8x64xf32>
    %c0_2 = arith.constant 0 : index
    %c0_3 = arith.constant 0 : index
    %4 = vector.load %arg3[%c0_2, %c0_3] : memref<8x32xbf16, #tpu.memory_space<vmem>>, vector<8x32xbf16>
    %c0_4 = arith.constant 0 : index
    %c0_5 = arith.constant 0 : index
    %5 = vector.load %arg4[%c0_4, %c0_5] : memref<32x64xbf16, #tpu.memory_space<vmem>>, vector<32x64xbf16>
    %cst = arith.constant dense<0.000000e+00> : vector<8x64xf32>
    %6 = tpu.matmul %4, %5, %cst {dimension_numbers = #tpu.dot_dimension_numbers<[1], [0], [0], [1], [0, 0, 1, 1], [], []>} : vector<8x32xbf16>, vector<32x64xbf16>, vector<8x64xf32> -> vector<8x64xf32>
    %7 = arith.addf %3, %6 : vector<8x64xf32>
    %c0_6 = arith.constant 0 : index
    %c0_7 = arith.constant 0 : index
    %8 = vector.load %arg7[%c0_6, %c0_7] : memref<8x64xf32, #tpu.memory_space<vmem>>, vector<8x64xf32>
    tpu.vector_store %arg7[%c0_6, %c0_7], %7 {strides = array<i32>} : memref<8x64xf32, #tpu.memory_space<vmem>>, vector<8x64xf32>,
    %c0_i32_8 = arith.constant 0 : i32
    %9 = arith.cmpi eq, %arg2, %c0_i32_8 : i32
    %10 = arith.extui %9 : i1 to i32
    %c0_i32_9 = arith.constant 0 : i32
    %11 = arith.cmpi ne, %10, %c0_i32_9 : i32
    scf.if %11 {
      %c0_10 = arith.constant 0 : index
      %c0_11 = arith.constant 0 : index
      %12 = vector.load %arg7[%c0_10, %c0_11] : memref<8x64xf32, #tpu.memory_space<vmem>>, vector<8x64xf32>
      %cst_12 = arith.constant 2.000000e-01 : f32
      %13 = vector.broadcast %cst_12 : f32 to vector<8x64xf32>
      %14 = arith.mulf %13, %12 : vector<8x64xf32>
      %15 = arith.maximumf %12, %14 : vector<8x64xf32>
      %c0_13 = arith.constant 0 : index
      %c0_14 = arith.constant 0 : index
      %16 = vector.load %arg6[%c0_13, %c0_14] : memref<8x64xf32, #tpu.memory_space<vmem>>, vector<8x64xf32>
      tpu.vector_store %arg6[%c0_13, %c0_14], %15 {strides = array<i32>} : memref<8x64xf32, #tpu.memory_space<vmem>>, vector<8x64xf32>,
    } else {
    }
    return
  }
  func.func @transform_0(%arg0: i32, %arg1: i32, %arg2: i32) -> (i32, i32) {
    %c0_i32 = arith.constant 0 : i32
    return %arg0, %arg2 : i32, i32
  }
  func.func @transform_1(%arg0: i32, %arg1: i32, %arg2: i32) -> (i32, i32) {
    %c0_i32 = arith.constant 0 : i32
    return %arg2, %arg1 : i32, i32
  }
  func.func @transform_2(%arg0: i32, %arg1: i32, %arg2: i32) -> (i32, i32) {
    %c0_i32 = arith.constant 0 : i32
    %c0_i32_0 = arith.constant 0 : i32
    return %c0_i32, %arg1 : i32, i32
  }
  func.func @transform_3(%arg0: i32, %arg1: i32, %arg2: i32) -> (i32, i32) {
    %c0_i32 = arith.constant 0 : i32
    return %arg0, %arg1 : i32, i32
  }
}

</mosaic_0001>

<llo_original>
// kernel: tpu_custom_call.1
$region0: #{tpu_custom_call.1}
  #allocation0 [shape = 'u32[]', space=smem, size = 0x4, offset = 0x4, fixed_abs, tag = 'smem constant byte address 0x4 - core index']
  #allocation1 [shape = 'u32[72,128]{1,0:T(1,128)}', space=vmem, size = 0x9000, scoped, tag = 'internal scratch']
  #allocation2 [shape = 'f32[8,64]{1,0:T(8,128)}', space=vmem, size = 0x1000, scoped, tag = 'scratch operand']
  %s0 = inlined_call_operand.hbm [shape: bf16[8,32], index: 0, kind: input, shape index: {}]
  %s1 = inlined_call_operand.hbm [shape: bf16[32,64], index: 1, kind: input, shape index: {}]
  %s2 = inlined_call_operand.vmem [shape: f32[1,64], index: 2, kind: input, shape index: {}]
  %s3 = inlined_call_operand.hbm [shape: f32[8,64], index: 3, kind: output, shape index: {}]
  %s4 = sld [smem:[#allocation0]]
  $region38: #{tpu_custom_call.1} parent=0
    _
  %s6 = ssub.s32 1, %s4
  %s7 = scalar_select 0, %s6, %s4
  $region1: #{tpu_custom_call.1} parent=0
    #allocation3 [shape = 'u8[2048]{0}', space=vmem, size = 0x800, scoped, tag = 'input window, operand 0, single buffered']
    #allocation4 [shape = 's32[1]{0}', space=sflag, size = 0x4, scoped, tag = 'scoped memory for tpu_custom_call.1']
    #allocation5 [shape = 's32[1]{0}', space=sflag, size = 0x4, scoped, tag = 'scoped memory for tpu_custom_call.1']
    #allocation6 [shape = 'u8[8192]{0}', space=vmem, size = 0x2000, scoped, tag = 'input window, operand 1, single buffered']
    #allocation7 [shape = 's32[1]{0}', space=sflag, size = 0x4, scoped, tag = 'scoped memory for tpu_custom_call.1']
    #allocation8 [shape = 'u8[4096]{0}', space=vmem, size = 0x1000, scoped, tag = 'output window, operand 0, single buffered']
    %8 = vsyncpa [#allocation4], 0
    %9 = vsyncpa [#allocation7], 0
    %10 = vsyncpa [#allocation5], 0
    // Predicated region
    $region2: #{tpu_custom_call.1} parent=1 // pred_check
      _
    $region3: #{tpu_custom_call.1} parent=1 // pred_check_branch
      %12 = sbr.rel (0) target = $region5
    $region4: #{tpu_custom_call.1} parent=1 // pred_region
      %14 = vsyncadd [#allocation4], 0
      %s16 = sshll.u32 %s0, 4
      %s17 = int_to_ptr.hbm [resolvable:$true] %s16
      %s18 = sshll.u32 [#allocation3], 4
      %s19 = int_to_ptr.vmem [resolvable:$true] %s18
      %21 = dma.hbm_to_vmem [thread:$0]  %s17, 64, %s19, [#allocation4]
    $region5: #{tpu_custom_call.1} parent=1 // pred_fallthru
      _
    // Predicated region
    $region6: #{tpu_custom_call.1} parent=1 // pred_check
      _
    $region7: #{tpu_custom_call.1} parent=1 // pred_check_branch
      %23 = sbr.rel (0) target = $region9
    $region8: #{tpu_custom_call.1} parent=1 // pred_region
      %25 = vsyncadd [#allocation7], 0
      %s26 = sshll.u32 %s1, 4
      %s27 = int_to_ptr.hbm [resolvable:$true] %s26
      %s28 = sshll.u32 [#allocation6], 4
      %s29 = int_to_ptr.vmem [resolvable:$true] %s28
      %34 = dma.hbm_to_vmem [thread:$0]  %s27, 256, %s29, [#allocation7], 64, 64, 4
    $region9: #{tpu_custom_call.1} parent=1 // pred_fallthru
      _
    // Predicated region
    $region10: #{tpu_custom_call.1} parent=1 // pred_check
      _
    $region11: #{tpu_custom_call.1} parent=1 // pred_check_branch
      %36 = sbr.rel (0) target = $region13
    $region12: #{tpu_custom_call.1} parent=1 // pred_region
      _
    $region13: #{tpu_custom_call.1} parent=1 // pred_fallthru
      _
    // Predicated region
    $region14: #{tpu_custom_call.1} parent=1 // pred_check
      _
    $region15: #{tpu_custom_call.1} parent=1 // pred_check_branch
      %38 = sbr.rel (0) target = $region17
    $region16: #{tpu_custom_call.1} parent=1 // pred_region
      %40 = dma.done [#allocation4], 64
    $region17: #{tpu_custom_call.1} parent=1 // pred_fallthru
      _
    // Predicated region
    $region18: #{tpu_custom_call.1} parent=1 // pred_check
      _
    $region19: #{tpu_custom_call.1} parent=1 // pred_check_branch
      %42 = sbr.rel (0) target = $region21
    $region20: #{tpu_custom_call.1} parent=1 // pred_region
      %44 = dma.done [#allocation7], 256
    $region21: #{tpu_custom_call.1} parent=1 // pred_fallthru
      _
    %p46 = scmp.eq.s32.totalorder 0, 0
    // Predicated region
    $region22: #{tpu_custom_call.1} parent=1 // pred_check
      %p47 = pneg %p46
    $region23: #{tpu_custom_call.1} parent=1 // pred_check_branch
      %49 = sbr.rel (%p47) target = $region25
    $region24: #{tpu_custom_call.1} parent=1 // pred_region
      %v50 = vld [vmem:[%s2] sm:$0x1]
      %v52 = vperm.slane %v50, 0
      %vm54 = vcmask 523264
      %55 = vst.msk [vmem:[#allocation2] sm:$0xff] %vm54, %v52
    $region25: #{tpu_custom_call.1} parent=1 // pred_fallthru
      _
    %v56 = vld [vmem:[#allocation2] sm:$0xff]
    %v57 = vld [vmem:[#allocation3] sm:$0xf]
    %v58 = vld [vmem:[#allocation6] sm:$0xf]
    %v59 = vld [vmem:[#allocation6 + $0x4] sm:$0xf]
    %v60 = vld [vmem:[#allocation6 + $0x8] sm:$0xf]
    %v61 = vld [vmem:[#allocation6 + $0xc] sm:$0xf]
    %v66 = vunpack.c.l.b16 %v58
    %v67 = vunpack.c.l.b16 %v59
    %v68 = vunpack.c.l.b16 %v60
    %v69 = vunpack.c.l.b16 %v61
    %v70 = vpack.c.b16 %v67, %v66
    %v71 = vpack.c.b16 %v69, %v68
    %vm74 = vcmask 261120
    %v76 = vsel %vm74, %v57, 0
    %78 = vmatpush.bf16.msra.mxu0 0
    %79 = vmatpush.bf16.msra.mxu0 0
    %80 = vmatpush.bf16.msra.mxu0 0
    %81 = vmatpush.bf16.msra.mxu0 0
    %82 = vmatpush.bf16.msra.mxu0 0
    %83 = vmatpush.bf16.msra.mxu0 0
    %84 = vmatpush.bf16.msra.mxu0 %v71
    %85 = vmatpush.bf16.msra.mxu0 %v70
    %86 = vmatmul.bf16.gmra.mxu0 %v76
    %v87 = vpop.f32.mrf.mxu0
    %v88 = vadd.f32 0.0, %v87
    %v89 = vpop.f32.mrf.mxu0
    %90 = vdwg.mxu0
    %v91 = vadd.f32 %v56, %v88
    %vm92 = vcmask 523264
    %93 = vst.msk [vmem:[#allocation2] sm:$0xff] %vm92, %v91
    // Predicated region
    $region26: #{tpu_custom_call.1} parent=1 // pred_check
      %p94 = pneg %p46
    $region27: #{tpu_custom_call.1} parent=1 // pred_check_branch
      %96 = sbr.rel (%p94) target = $region29
    $region28: #{tpu_custom_call.1} parent=1 // pred_region
      %v97 = vld [vmem:[#allocation2] sm:$0xff]
      %v98 = vmul.f32 %v97, 0.2
      %v99 = vmax.f32 %v97, %v98
      %100 = vst.msk [vmem:[#allocation8] sm:$0xff] %vm92, %v99
    $region29: #{tpu_custom_call.1} parent=1 // pred_fallthru
      _
    // Predicated region
    $region30: #{tpu_custom_call.1} parent=1 // pred_check
      _
    $region31: #{tpu_custom_call.1} parent=1 // pred_check_branch
      %102 = sbr.rel (0) target = $region33
    $region32: #{tpu_custom_call.1} parent=1 // pred_region
      %104 = vsyncadd [#allocation5], 0
      %s106 = sshll.u32 [#allocation8], 4
      %s107 = int_to_ptr.vmem [resolvable:$true] %s106
      %s108 = sshll.u32 %s3, 4
      %s109 = int_to_ptr.hbm [resolvable:$true] %s108
      %111 = dma.vmem_to_hbm [thread:$0]  %s107, 128, %s109, [#allocation5]
    $region33: #{tpu_custom_call.1} parent=1 // pred_fallthru
      _
    // Predicated region
    $region34: #{tpu_custom_call.1} parent=1 // pred_check
      _
    $region35: #{tpu_custom_call.1} parent=1 // pred_check_branch
      %113 = sbr.rel (0) target = $region37
    $region36: #{tpu_custom_call.1} parent=1 // pred_region
      %115 = dma.done [#allocation5], 128
    $region37: #{tpu_custom_call.1} parent=1 // pred_fallthru
      _
    %116 = vsyncpa [#allocation4], 1
    %117 = vsyncpa [#allocation7], 1
    %118 = vsyncpa [#allocation5], 1

</llo_original>
